<compile_context>
chip_gen: v7x
topology: tpu7x:2x2x1
jax: 0.10.0
libtpu: 0.0.40
codegen_flags: <defaults>
</compile_context>

<pallas_src>
import numpy as np
import jax
import jax.numpy as jnp
from jax.experimental import pallas as pl
from jax.experimental.pallas import tpu as pltpu


def _round_up(x, m):
    return ((x + m - 1) // m) * m


def _pick_tile(total, candidates):
    """Largest candidate tile that divides `total` (total is a multiple of 128)."""
    for c in candidates:
        if total % c == 0:
            return c
    return 128


# ---------------------------------------------------------------------------
# Kernel 1: per-node path indicators.
#   active[n]   = label[n] >= 0
#   in_node[n]  = active[n] and NOT exists m on same path with frame[m] < frame[n]
#   out_node[n] = active[n] and NOT exists m on same path with frame[m] > frame[n]
# Grid = (lane tiles over n ["parallel"], row chunks over m ["arbitrary"]).
# Counts n_same / n_earlier are accumulated across row chunks in VMEM scratch;
# n_later is derived as n_same - n_earlier - 1 at finalize.
# ---------------------------------------------------------------------------
def node_indicator_kernel(lab_col_ref, frm_col_ref, lab_row_ref, frm_row_ref,
                          in_ref, out_ref, act_ref, nsame_acc, nearly_acc):
    k = pl.program_id(1)

    @pl.when(k == 0)
    def _init():
        nsame_acc[...] = jnp.zeros_like(nsame_acc)
        nearly_acc[...] = jnp.zeros_like(nearly_acc)

    lab_col = lab_col_ref[...]          # (TM, 1) int32, -1 => inactive / pad
    frm_col = frm_col_ref[...]          # (TM, 1) int32
    lab_row = lab_row_ref[...]          # (1, TN) int32
    frm_row = frm_row_ref[...]          # (1, TN) int32

    # same[m, n] = 1 iff node m and node n belong to the same (active) path.
    same = jnp.logical_and(lab_col == lab_row, lab_row >= 0)        # (TM, TN)
    earlier = jnp.logical_and(same, frm_col < frm_row)              # (TM, TN)

    tm = lab_col.shape[0]
    ones_row = jnp.ones((1, tm), jnp.bfloat16)
    nsame_acc[...] += jnp.dot(ones_row, same.astype(jnp.bfloat16),
                              preferred_element_type=jnp.float32)   # (1, TN)
    nearly_acc[...] += jnp.dot(ones_row, earlier.astype(jnp.bfloat16),
                               preferred_element_type=jnp.float32)  # (1, TN)

    @pl.when(k == pl.num_programs(1) - 1)
    def _finalize():
        active = lab_row >= 0                                       # (1, TN)
        act_f = active.astype(jnp.float32)
        n_same = nsame_acc[...]          # includes self for active nodes
        n_earlier = nearly_acc[...]
        # n_later = n_same - n_earlier - 1  (>= 0 for active nodes; precondition:
        # a path has at most one node per frame).
        in_ref[...] = act_f * (n_earlier < 0.5).astype(jnp.float32)           # first node
        out_ref[...] = act_f * ((n_same - n_earlier) < 1.5).astype(jnp.float32)  # last node
        act_ref[...] = act_f


# ---------------------------------------------------------------------------
# Kernel 2: edge activation on pre-gathered labels, sublane-dense layout.
#   activated_edges[e] = (label[src[e]] == label[snk[e]]) && label[src[e]] >= 0
# ---------------------------------------------------------------------------
def edge_indicator_kernel(src_lab_ref, snk_lab_ref, edge_ref):
    src_lab = src_lab_ref[...]          # (8, TE) int32
    snk_lab = snk_lab_ref[...]          # (8, TE) int32
    act = jnp.logical_and(src_lab == snk_lab, src_lab >= 0)
    edge_ref[...] = act.astype(jnp.float32)


def recover_indicators_pallas(node_labels, node_frames, edge_sources, edge_sinks):
    """node_labels/node_frames: (N,); edge_sources/edge_sinks: (E,) int."""
    node_labels = jnp.asarray(node_labels, jnp.int32)
    node_frames = jnp.asarray(node_frames, jnp.int32)
    edge_sources = jnp.asarray(edge_sources, jnp.int32)
    edge_sinks = jnp.asarray(edge_sinks, jnp.int32)

    N = int(node_labels.shape[0])
    E = int(edge_sources.shape[0])

    # ----- node indicators -----
    N_pad = _round_up(max(N, 1), 128)
    # TM: row-chunk of the reduction axis (bounds per-step VMEM to O(TM*TN)).
    # TN: lane tile of the output axis.  (TM=1024, TN=512) ~= 6-8 MiB live
    # temporaries -> safe on v5e/v6e/v7x scoped-VMEM defaults.
    TM = _pick_tile(N_pad, (1024, 512, 256, 128))
    TN = _pick_tile(N_pad, (512, 256, 128))

    lab = jnp.full((N_pad,), -1, jnp.int32).at[:N].set(node_labels)
    frm = jnp.full((N_pad,), -1, jnp.int32).at[:N].set(node_frames)

    lab_col = lab.reshape(N_pad, 1)
    frm_col = frm.reshape(N_pad, 1)
    lab_row = lab.reshape(1, N_pad)
    frm_row = frm.reshape(1, N_pad)

    in_n, out_n, act_n = pl.pallas_call(
        node_indicator_kernel,
        grid=(N_pad // TN, N_pad // TM),           # (parallel lane tiles, reduction chunks)
        in_specs=[
            pl.BlockSpec((TM, 1), lambda i, k: (k, 0)),
            pl.BlockSpec((TM, 1), lambda i, k: (k, 0)),
            pl.BlockSpec((1, TN), lambda i, k: (0, i)),
            pl.BlockSpec((1, TN), lambda i, k: (0, i)),
        ],
        out_specs=[
            pl.BlockSpec((1, TN), lambda i, k: (0, i)),
            pl.BlockSpec((1, TN), lambda i, k: (0, i)),
            pl.BlockSpec((1, TN), lambda i, k: (0, i)),
        ],
        out_shape=(
            jax.ShapeDtypeStruct((1, N_pad), jnp.float32),
            jax.ShapeDtypeStruct((1, N_pad), jnp.float32),
            jax.ShapeDtypeStruct((1, N_pad), jnp.float32),
        ),
        scratch_shapes=[
            pltpu.VMEM((1, TN), jnp.float32),      # n_same accumulator
            pltpu.VMEM((1, TN), jnp.float32),      # n_earlier accumulator
        ],
        compiler_params=pltpu.CompilerParams(
            dimension_semantics=("parallel", "arbitrary"),
            vmem_limit_bytes=32 << 20),
    )(lab_col, frm_col, lab_row, frm_row)

    # ----- edge activation -----
    # Gather labels at edge endpoints outside the kernel (O(E)); pack the edge
    # axis sublane-dense as (8, E_pad/8) so every vreg is full.
    E_pad = _round_up(max(E, 1), 8 * 128)
    Ce = E_pad // 8
    TE = _pick_tile(Ce, (4096, 2048, 1024, 512, 256, 128))

    src_idx = jnp.zeros((E_pad,), jnp.int32).at[:E].set(edge_sources)
    snk_idx = jnp.zeros((E_pad,), jnp.int32).at[:E].set(edge_sinks)
    src_lab = jnp.take(lab, src_idx).reshape(8, Ce)
    snk_lab = jnp.take(lab, snk_idx).reshape(8, Ce)

    act_e2 = pl.pallas_call(
        edge_indicator_kernel,
        grid=(Ce // TE,),
        in_specs=[
            pl.BlockSpec((8, TE), lambda i: (0, i)),
            pl.BlockSpec((8, TE), lambda i: (0, i)),
        ],
        out_specs=pl.BlockSpec((8, TE), lambda i: (0, i)),
        out_shape=jax.ShapeDtypeStruct((8, Ce), jnp.float32),
        compiler_params=pltpu.CompilerParams(
            dimension_semantics=("parallel",)),
    )(src_lab, snk_lab)
    act_e = act_e2.reshape(1, E_pad)[:, :E]

    return in_n[:, :N], out_n[:, :N], act_n[:, :N], act_e


def lifted_solver_forward(costs):
    """
    Mirrors LiftedSolver.forward:
      costs = {node_frames: (1,N), edge_costs: (1,E), edge_sources: (1,E), edge_sinks: (1,E)}
      result = {in_nodes, out_nodes, activated_nodes, node_ids: (1,N), activated_edges: (1,E)}
    """
    node_frames = costs["node_frames"][0]
    edge_sources = costs["edge_sources"][0]
    edge_sinks = costs["edge_sinks"][0]

    # TODO(synk): the real forward runs the LPMP lifted-disjoint-paths ILP solver
    # (lpmp_py.lpd) to obtain `paths`; no Pallas equivalent exists. Substitute a
    # deterministic synthetic assignment (k-th detection in every frame = track k)
    # and implement the downstream indicator recovery in Pallas. This host-side
    # numpy stub forces a device->host sync; acceptable only because it stands
    # in for the external solver.
    node_frames_np = np.asarray(node_frames)
    uniq, first_idx = np.unique(node_frames_np, return_index=True)
    frame_pos = np.searchsorted(uniq, node_frames_np)
    labels_np = np.arange(node_frames_np.size) - first_idx[frame_pos]
    node_labels = jnp.asarray(labels_np, jnp.int32)

    in_n, out_n, act_n, act_e = recover_indicators_pallas(
        node_labels, node_frames, edge_sources, edge_sinks)

    node_ids = jnp.where(act_n[0] > 0, node_labels.astype(jnp.float32), -1.0)[None, :]
    return {
        "in_nodes": in_n,
        "out_nodes": out_n,
        "activated_nodes": act_n,
        "node_ids": node_ids,
        "activated_edges": act_e,
    }


def _numpy_reference(node_frames, labels, edge_sources, edge_sinks):
    """Pure numpy mirror of LiftedSolver.recover_indicators given path labels."""
    N = len(node_frames)
    paths = [list(np.where(labels == i)[0]) for i in np.unique(labels)]
    in_nodes, out_nodes, activated = np.zeros(N), np.zeros(N), np.zeros(N)
    node_ids = -np.ones(N)
    edge_map = np.zeros((N, N))
    for i, t in enumerate(paths):
        t = np.asarray(t)
        in_nodes[t[0]] = 1
        out_nodes[t[-1]] = 1
        activated[t] = 1
        node_ids[t] = i
        edge_map[np.repeat(t, len(t)), np.tile(t, len(t))] = 1.0
    act_edges = edge_map[edge_sources.astype(int), edge_sinks.astype(int)]
    return in_nodes[None], out_nodes[None], activated[None], act_edges[None], node_ids[None]


if __name__ == "__main__":
    # Small synthetic tracking instance: 8 frames, 3 detections per frame.
    num_frames, nodes_per_frame = 8, 3
    node_frames_np = np.repeat(np.arange(num_frames), nodes_per_frame)  # sorted, as required
    N = node_frames_np.size

    srcs, snks = [], []
    for u in range(N):
        for v in range(N):
            if node_frames_np[v] == node_frames_np[u] + 1:
                srcs.append(u)
                snks.append(v)
    srcs = np.asarray(srcs, np.int32)
    snks = np.asarray(snks, np.int32)
    E = srcs.size

    key = jax.random.PRNGKey(0)
    edge_costs = jax.random.normal(key, (1, E), dtype=jnp.float32)

    costs = {
        "node_frames": jnp.asarray(node_frames_np, jnp.int32)[None, :],
        "edge_costs": edge_costs,
        "edge_sources": jnp.asarray(srcs)[None, :],
        "edge_sinks": jnp.asarray(snks)[None, :],
    }

    result = lifted_solver_forward(costs)
    jax.block_until_ready(result)

    # Correctness check against a numpy mirror of recover_indicators.
    labels_np = np.tile(np.arange(nodes_per_frame), num_frames)
    ref_in, ref_out, ref_act, ref_edges, ref_ids = _numpy_reference(
        node_frames_np, labels_np, srcs, snks)
    np.testing.assert_allclose(np.asarray(result["in_nodes"]), ref_in, atol=1e-6)
    np.testing.assert_allclose(np.asarray(result["out_nodes"]), ref_out, atol=1e-6)
    np.testing.assert_allclose(np.asarray(result["activated_nodes"]), ref_act, atol=1e-6)
    np.testing.assert_allclose(np.asarray(result["activated_edges"]), ref_edges, atol=1e-6)
    np.testing.assert_allclose(np.asarray(result["node_ids"]), ref_ids, atol=1e-6)

    print("KERNEL_OK")
</pallas_src>

<mosaic_0001>
module attributes {stable_mosaic.version = 11 : i64} {
  func.func @node_indicator_kernel(%arg0: i32, %arg1: i32, %arg2: memref<128x1xi32, #tpu.memory_space<vmem>>, %arg3: memref<128x1xi32, #tpu.memory_space<vmem>>, %arg4: memref<1x128xi32, #tpu.memory_space<vmem>>, %arg5: memref<1x128xi32, #tpu.memory_space<vmem>>, %arg6: memref<1x128xf32, #tpu.memory_space<vmem>>, %arg7: memref<1x128xf32, #tpu.memory_space<vmem>>, %arg8: memref<1x128xf32, #tpu.memory_space<vmem>>, %arg9: memref<1x128xf32, #tpu.memory_space<vmem>>, %arg10: memref<1x128xf32, #tpu.memory_space<vmem>>) attributes {dimension_semantics = [#tpu.dimension_semantics<parallel>, #tpu.dimension_semantics<arbitrary>], iteration_bounds = array<i64: 1, 1>, scalar_prefetch = 0 : i64, scratch_operands = 2 : i64, tpu.core_type = #tpu.core_type<tc>, window_params = [{transform_indices = @transform_0, window_bounds = array<i64: 128, 1>}, {transform_indices = @transform_1, window_bounds = array<i64: 128, 1>}, {transform_indices = @transform_2, window_bounds = array<i64: 1, 128>}, {transform_indices = @transform_3, window_bounds = array<i64: 1, 128>}, {transform_indices = @transform_4, window_bounds = array<i64: 1, 128>}, {transform_indices = @transform_5, window_bounds = array<i64: 1, 128>}, {transform_indices = @transform_6, window_bounds = array<i64: 1, 128>}]} {
    %c0_i32 = arith.constant 0 : i32
    %0 = arith.cmpi eq, %arg1, %c0_i32 : i32
    %1 = arith.extui %0 : i1 to i32
    %c0_i32_0 = arith.constant 0 : i32
    %2 = arith.cmpi ne, %1, %c0_i32_0 : i32
    scf.if %2 {
      %cst_21 = arith.constant 0.000000e+00 : f32
      %36 = vector.broadcast %cst_21 : f32 to vector<1x128xf32>
      %c0_22 = arith.constant 0 : index
      %c0_23 = arith.constant 0 : index
      %37 = vector.load %arg9[%c0_22, %c0_23] : memref<1x128xf32, #tpu.memory_space<vmem>>, vector<1x128xf32>
      tpu.vector_store %arg9[%c0_22, %c0_23], %36 {strides = array<i32>} : memref<1x128xf32, #tpu.memory_space<vmem>>, vector<1x128xf32>,
      %cst_24 = arith.constant 0.000000e+00 : f32
      %38 = vector.broadcast %cst_24 : f32 to vector<1x128xf32>
      %c0_25 = arith.constant 0 : index
      %c0_26 = arith.constant 0 : index
      %39 = vector.load %arg10[%c0_25, %c0_26] : memref<1x128xf32, #tpu.memory_space<vmem>>, vector<1x128xf32>
      tpu.vector_store %arg10[%c0_25, %c0_26], %38 {strides = array<i32>} : memref<1x128xf32, #tpu.memory_space<vmem>>, vector<1x128xf32>,
    } else {
    }
    %c0 = arith.constant 0 : index
    %c0_1 = arith.constant 0 : index
    %3 = vector.load %arg2[%c0, %c0_1] : memref<128x1xi32, #tpu.memory_space<vmem>>, vector<128x1xi32>
    %c0_2 = arith.constant 0 : index
    %c0_3 = arith.constant 0 : index
    %4 = vector.load %arg3[%c0_2, %c0_3] : memref<128x1xi32, #tpu.memory_space<vmem>>, vector<128x1xi32>
    %c0_4 = arith.constant 0 : index
    %c0_5 = arith.constant 0 : index
    %5 = vector.load %arg4[%c0_4, %c0_5] : memref<1x128xi32, #tpu.memory_space<vmem>>, vector<1x128xi32>
    %c0_6 = arith.constant 0 : index
    %c0_7 = arith.constant 0 : index
    %6 = vector.load %arg5[%c0_6, %c0_7] : memref<1x128xi32, #tpu.memory_space<vmem>>, vector<1x128xi32>
    %7 = vector.broadcast %3 : vector<128x1xi32> to vector<128x128xi32>
    %8 = vector.broadcast %5 : vector<1x128xi32> to vector<128x128xi32>
    %9 = arith.cmpi eq, %7, %8 : vector<128x128xi32>
    %c0_i32_8 = arith.constant 0 : i32
    %10 = vector.broadcast %c0_i32_8 : i32 to vector<1x128xi32>
    %11 = arith.cmpi sge, %5, %10 : vector<1x128xi32>
    %12 = vector.broadcast %11 : vector<1x128xi1> to vector<128x128xi1>
    %13 = arith.andi %9, %12 : vector<128x128xi1>
    %14 = vector.broadcast %4 : vector<128x1xi32> to vector<128x128xi32>
    %15 = vector.broadcast %6 : vector<1x128xi32> to vector<128x128xi32>
    %16 = arith.cmpi slt, %14, %15 : vector<128x128xi32>
    %17 = arith.andi %13, %16 : vector<128x128xi1>
    %cst = arith.constant 1.000000e+00 : bf16
    %18 = vector.broadcast %cst : bf16 to vector<1x128xbf16>
    %c0_9 = arith.constant 0 : index
    %c0_10 = arith.constant 0 : index
    %19 = vector.load %arg9[%c0_9, %c0_10] : memref<1x128xf32, #tpu.memory_space<vmem>>, vector<1x128xf32>
    %20 = arith.extui %13 : vector<128x128xi1> to vector<128x128xi32>
    %21 = arith.sitofp %20 : vector<128x128xi32> to vector<128x128xf32>
    %22 = arith.truncf %21 : vector<128x128xf32> to vector<128x128xbf16>
    %cst_11 = arith.constant dense<0.000000e+00> : vector<1x128xf32>
    %23 = tpu.matmul %18, %22, %cst_11 {dimension_numbers = #tpu.dot_dimension_numbers<[1], [0], [0], [1], [0, 0, 1, 1], [], []>} : vector<1x128xbf16>, vector<128x128xbf16>, vector<1x128xf32> -> vector<1x128xf32>
    %24 = arith.addf %19, %23 : vector<1x128xf32>
    %c0_12 = arith.constant 0 : index
    %c0_13 = arith.constant 0 : index
    %25 = vector.load %arg9[%c0_12, %c0_13] : memref<1x128xf32, #tpu.memory_space<vmem>>, vector<1x128xf32>
    tpu.vector_store %arg9[%c0_12, %c0_13], %24 {strides = array<i32>} : memref<1x128xf32, #tpu.memory_space<vmem>>, vector<1x128xf32>,
    %c0_14 = arith.constant 0 : index
    %c0_15 = arith.constant 0 : index
    %26 = vector.load %arg10[%c0_14, %c0_15] : memref<1x128xf32, #tpu.memory_space<vmem>>, vector<1x128xf32>
    %27 = arith.extui %17 : vector<128x128xi1> to vector<128x128xi32>
    %28 = arith.sitofp %27 : vector<128x128xi32> to vector<128x128xf32>
    %29 = arith.truncf %28 : vector<128x128xf32> to vector<128x128xbf16>
    %cst_16 = arith.constant dense<0.000000e+00> : vector<1x128xf32>
    %30 = tpu.matmul %18, %29, %cst_16 {dimension_numbers = #tpu.dot_dimension_numbers<[1], [0], [0], [1], [0, 0, 1, 1], [], []>} : vector<1x128xbf16>, vector<128x128xbf16>, vector<1x128xf32> -> vector<1x128xf32>
    %31 = arith.addf %26, %30 : vector<1x128xf32>
    %c0_17 = arith.constant 0 : index
    %c0_18 = arith.constant 0 : index
    %32 = vector.load %arg10[%c0_17, %c0_18] : memref<1x128xf32, #tpu.memory_space<vmem>>, vector<1x128xf32>
    tpu.vector_store %arg10[%c0_17, %c0_18], %31 {strides = array<i32>} : memref<1x128xf32, #tpu.memory_space<vmem>>, vector<1x128xf32>,
    %c0_i32_19 = arith.constant 0 : i32
    %33 = arith.cmpi eq, %arg1, %c0_i32_19 : i32
    %34 = arith.extui %33 : i1 to i32
    %c0_i32_20 = arith.constant 0 : i32
    %35 = arith.cmpi ne, %34, %c0_i32_20 : i32
    scf.if %35 {
      %c0_i32_21 = arith.constant 0 : i32
      %36 = vector.broadcast %c0_i32_21 : i32 to vector<1x128xi32>
      %37 = arith.cmpi sge, %5, %36 : vector<1x128xi32>
      %38 = arith.extui %37 : vector<1x128xi1> to vector<1x128xi32>
      %39 = arith.sitofp %38 : vector<1x128xi32> to vector<1x128xf32>
      %c0_22 = arith.constant 0 : index
      %c0_23 = arith.constant 0 : index
      %40 = vector.load %arg9[%c0_22, %c0_23] : memref<1x128xf32, #tpu.memory_space<vmem>>, vector<1x128xf32>
      %c0_24 = arith.constant 0 : index
      %c0_25 = arith.constant 0 : index
      %41 = vector.load %arg10[%c0_24, %c0_25] : memref<1x128xf32, #tpu.memory_space<vmem>>, vector<1x128xf32>
      %cst_26 = arith.constant 5.000000e-01 : f32
      %42 = vector.broadcast %cst_26 : f32 to vector<1x128xf32>
      %43 = arith.cmpf olt, %41, %42 : vector<1x128xf32>
      %44 = arith.extui %43 : vector<1x128xi1> to vector<1x128xi32>
      %45 = arith.sitofp %44 : vector<1x128xi32> to vector<1x128xf32>
      %46 = arith.mulf %39, %45 : vector<1x128xf32>
      %c0_27 = arith.constant 0 : index
      %c0_28 = arith.constant 0 : index
      %47 = vector.load %arg6[%c0_27, %c0_28] : memref<1x128xf32, #tpu.memory_space<vmem>>, vector<1x128xf32>
      tpu.vector_store %arg6[%c0_27, %c0_28], %46 {strides = array<i32>} : memref<1x128xf32, #tpu.memory_space<vmem>>, vector<1x128xf32>,
      %48 = arith.subf %40, %41 : vector<1x128xf32>
      %cst_29 = arith.constant 1.500000e+00 : f32
      %49 = vector.broadcast %cst_29 : f32 to vector<1x128xf32>
      %50 = arith.cmpf olt, %48, %49 : vector<1x128xf32>
      %51 = arith.extui %50 : vector<1x128xi1> to vector<1x128xi32>
      %52 = arith.sitofp %51 : vector<1x128xi32> to vector<1x128xf32>
      %53 = arith.mulf %39, %52 : vector<1x128xf32>
      %c0_30 = arith.constant 0 : index
      %c0_31 = arith.constant 0 : index
      %54 = vector.load %arg7[%c0_30, %c0_31] : memref<1x128xf32, #tpu.memory_space<vmem>>, vector<1x128xf32>
      tpu.vector_store %arg7[%c0_30, %c0_31], %53 {strides = array<i32>} : memref<1x128xf32, #tpu.memory_space<vmem>>, vector<1x128xf32>,
      %c0_32 = arith.constant 0 : index
      %c0_33 = arith.constant 0 : index
      %55 = vector.load %arg8[%c0_32, %c0_33] : memref<1x128xf32, #tpu.memory_space<vmem>>, vector<1x128xf32>
      tpu.vector_store %arg8[%c0_32, %c0_33], %39 {strides = array<i32>} : memref<1x128xf32, #tpu.memory_space<vmem>>, vector<1x128xf32>,
    } else {
    }
    return
  }
  func.func @transform_0(%arg0: i32, %arg1: i32) -> (i32, i32) {
    %c0_i32 = arith.constant 0 : i32
    %c0_i32_0 = arith.constant 0 : i32
    return %arg1, %c0_i32 : i32, i32
  }
  func.func @transform_1(%arg0: i32, %arg1: i32) -> (i32, i32) {
    %c0_i32 = arith.constant 0 : i32
    %c0_i32_0 = arith.constant 0 : i32
    return %arg1, %c0_i32 : i32, i32
  }
  func.func @transform_2(%arg0: i32, %arg1: i32) -> (i32, i32) {
    %c0_i32 = arith.constant 0 : i32
    %c0_i32_0 = arith.constant 0 : i32
    return %c0_i32, %arg0 : i32, i32
  }
  func.func @transform_3(%arg0: i32, %arg1: i32) -> (i32, i32) {
    %c0_i32 = arith.constant 0 : i32
    %c0_i32_0 = arith.constant 0 : i32
    return %c0_i32, %arg0 : i32, i32
  }
  func.func @transform_4(%arg0: i32, %arg1: i32) -> (i32, i32) {
    %c0_i32 = arith.constant 0 : i32
    %c0_i32_0 = arith.constant 0 : i32
    return %c0_i32, %arg0 : i32, i32
  }
  func.func @transform_5(%arg0: i32, %arg1: i32) -> (i32, i32) {
    %c0_i32 = arith.constant 0 : i32
    %c0_i32_0 = arith.constant 0 : i32
    return %c0_i32, %arg0 : i32, i32
  }
  func.func @transform_6(%arg0: i32, %arg1: i32) -> (i32, i32) {
    %c0_i32 = arith.constant 0 : i32
    %c0_i32_0 = arith.constant 0 : i32
    return %c0_i32, %arg0 : i32, i32
  }
}

</mosaic_0001>

<llo_original>
// kernel: tpu_custom_call.1
$region0: #{tpu_custom_call.1}
  #allocation0 [shape = 'u32[]', space=smem, size = 0x4, offset = 0x4, fixed_abs, tag = 'smem constant byte address 0x4 - core index']
  #allocation1 [shape = 'u32[144,128]{1,0:T(1,128)}', space=vmem, size = 0x12000, scoped, tag = 'internal scratch']
  #allocation2 [shape = 'f32[1,128]{1,0:T(1,128)}', space=vmem, size = 0x200, scoped, tag = 'scratch operand']
  #allocation3 [shape = 'f32[1,128]{1,0:T(1,128)}', space=vmem, size = 0x200, scoped, tag = 'scratch operand']
  %s0 = inlined_call_operand.vmem [shape: s32[128,1], index: 0, kind: input, shape index: {}]
  %s1 = inlined_call_operand.vmem [shape: s32[128,1], index: 1, kind: input, shape index: {}]
  %s2 = inlined_call_operand.vmem [shape: s32[1,128], index: 2, kind: input, shape index: {}]
  %s3 = inlined_call_operand.vmem [shape: s32[1,128], index: 3, kind: input, shape index: {}]
  %s4 = inlined_call_operand.hbm [shape: f32[1,128], index: 4, kind: output, shape index: {0}]
  %s5 = inlined_call_operand.hbm [shape: f32[1,128], index: 5, kind: output, shape index: {1}]
  %s6 = inlined_call_operand.hbm [shape: f32[1,128], index: 6, kind: output, shape index: {2}]
  %7 = xla_tuple %s4, %s5, %s6
  %s8 = sld [smem:[#allocation0]]
  $region50: #{tpu_custom_call.1} parent=0
    _
  %s10 = ssub.s32 1, %s8
  %s11 = scalar_select 0, %s10, %s8
  $region1: #{tpu_custom_call.1} parent=0
    #allocation4 [shape = 'u8[512]{0}', space=vmem, size = 0x400, scoped, tag = 'output window, operand 0, single buffered']
    #allocation5 [shape = 's32[1]{0}', space=sflag, size = 0x4, scoped, tag = 'scoped memory for tpu_custom_call.1']
    #allocation6 [shape = 'u8[512]{0}', space=vmem, size = 0x400, scoped, tag = 'output window, operand 1, single buffered']
    #allocation7 [shape = 's32[1]{0}', space=sflag, size = 0x4, scoped, tag = 'scoped memory for tpu_custom_call.1']
    #allocation8 [shape = 'u8[512]{0}', space=vmem, size = 0x400, scoped, tag = 'output window, operand 2, single buffered']
    %12 = vsyncpa [#allocation5], 0
    %13 = vsyncpa [#allocation7], 0
    // Predicated region
    $region2: #{tpu_custom_call.1} parent=1 // pred_check
      _
    $region3: #{tpu_custom_call.1} parent=1 // pred_check_branch
      %15 = sbr.rel (0) target = $region5
    $region4: #{tpu_custom_call.1} parent=1 // pred_region
      _
    $region5: #{tpu_custom_call.1} parent=1 // pred_fallthru
      _
    // Predicated region
    $region6: #{tpu_custom_call.1} parent=1 // pred_check
      _
    $region7: #{tpu_custom_call.1} parent=1 // pred_check_branch
      %17 = sbr.rel (0) target = $region9
    $region8: #{tpu_custom_call.1} parent=1 // pred_region
      _
    $region9: #{tpu_custom_call.1} parent=1 // pred_fallthru
      _
    // Predicated region
    $region10: #{tpu_custom_call.1} parent=1 // pred_check
      _
    $region11: #{tpu_custom_call.1} parent=1 // pred_check_branch
      %19 = sbr.rel (0) target = $region13
    $region12: #{tpu_custom_call.1} parent=1 // pred_region
      _
    $region13: #{tpu_custom_call.1} parent=1 // pred_fallthru
      _
    // Predicated region
    $region14: #{tpu_custom_call.1} parent=1 // pred_check
      _
    $region15: #{tpu_custom_call.1} parent=1 // pred_check_branch
      %21 = sbr.rel (0) target = $region17
    $region16: #{tpu_custom_call.1} parent=1 // pred_region
      _
    $region17: #{tpu_custom_call.1} parent=1 // pred_fallthru
      _
    %p24 = scmp.eq.s32.totalorder 0, 0
    // Predicated region
    $region18: #{tpu_custom_call.1} parent=1 // pred_check
      %p25 = pneg %p24
    $region19: #{tpu_custom_call.1} parent=1 // pred_check_branch
      %27 = sbr.rel (%p25) target = $region21
    $region20: #{tpu_custom_call.1} parent=1 // pred_region
      %28 = vst [vmem:[#allocation2] sm:$0x1] 0.0
      %29 = vst [vmem:[#allocation3] sm:$0x1] 0.0
    $region21: #{tpu_custom_call.1} parent=1 // pred_fallthru
      _
    %v30 = vld [vmem:[%s0] sm:$0xff]
    %v31 = vld [vmem:[%s0 + $0x8] sm:$0xff]
    %v32 = vld [vmem:[%s0 + $0x10] sm:$0xff]
    %v33 = vld [vmem:[%s0 + $0x18] sm:$0xff]
    %v34 = vld [vmem:[%s0 + $0x20] sm:$0xff]
    %v35 = vld [vmem:[%s0 + $0x28] sm:$0xff]
    %v36 = vld [vmem:[%s0 + $0x30] sm:$0xff]
    %v37 = vld [vmem:[%s0 + $0x38] sm:$0xff]
    %v38 = vld [vmem:[%s0 + $0x40] sm:$0xff]
    %v39 = vld [vmem:[%s0 + $0x48] sm:$0xff]
    %v40 = vld [vmem:[%s0 + $0x50] sm:$0xff]
    %v41 = vld [vmem:[%s0 + $0x58] sm:$0xff]
    %v42 = vld [vmem:[%s0 + $0x60] sm:$0xff]
    %v43 = vld [vmem:[%s0 + $0x68] sm:$0xff]
    %v44 = vld [vmem:[%s0 + $0x70] sm:$0xff]
    %v45 = vld [vmem:[%s0 + $0x78] sm:$0xff]
    %v46 = vld [vmem:[%s1] sm:$0xff]
    %v47 = vld [vmem:[%s1 + $0x8] sm:$0xff]
    %v48 = vld [vmem:[%s1 + $0x10] sm:$0xff]
    %v49 = vld [vmem:[%s1 + $0x18] sm:$0xff]
    %v50 = vld [vmem:[%s1 + $0x20] sm:$0xff]
    %v51 = vld [vmem:[%s1 + $0x28] sm:$0xff]
    %v52 = vld [vmem:[%s1 + $0x30] sm:$0xff]
    %v53 = vld [vmem:[%s1 + $0x38] sm:$0xff]
    %v54 = vld [vmem:[%s1 + $0x40] sm:$0xff]
    %v55 = vld [vmem:[%s1 + $0x48] sm:$0xff]
    %v56 = vld [vmem:[%s1 + $0x50] sm:$0xff]
    %v57 = vld [vmem:[%s1 + $0x58] sm:$0xff]
    %v58 = vld [vmem:[%s1 + $0x60] sm:$0xff]
    %v59 = vld [vmem:[%s1 + $0x68] sm:$0xff]
    %v60 = vld [vmem:[%s1 + $0x70] sm:$0xff]
    %v61 = vld [vmem:[%s1 + $0x78] sm:$0xff]
    %v62 = vld [vmem:[%s2] sm:$0x1]
    %v63 = vld [vmem:[%s3] sm:$0x1]
    %64 = vset.pattern.permute.xlu0 0
    %65 = vperm.xlu0 %64, %v30
    %v66 = vpop.permute.xlu0 %65
    %67 = vset.pattern.permute.xlu0 0
    %68 = vperm.xlu0 %67, %v31
    %v69 = vpop.permute.xlu0 %68
    %70 = vset.pattern.permute.xlu0 0
    %71 = vperm.xlu0 %70, %v32
    %v72 = vpop.permute.xlu0 %71
    %73 = vset.pattern.permute.xlu0 0
    %74 = vperm.xlu0 %73, %v33
    %v75 = vpop.permute.xlu0 %74
    %76 = vset.pattern.permute.xlu0 0
    %77 = vperm.xlu0 %76, %v34
    %v78 = vpop.permute.xlu0 %77
    %79 = vset.pattern.permute.xlu0 0
    %80 = vperm.xlu0 %79, %v35
    %v81 = vpop.permute.xlu0 %80
    %82 = vset.pattern.permute.xlu0 0
    %83 = vperm.xlu0 %82, %v36
    %v84 = vpop.permute.xlu0 %83
    %85 = vset.pattern.permute.xlu0 0
    %86 = vperm.xlu0 %85, %v37
    %v87 = vpop.permute.xlu0 %86
    %88 = vset.pattern.permute.xlu0 0
    %89 = vperm.xlu0 %88, %v38
    %v90 = vpop.permute.xlu0 %89
    %91 = vset.pattern.permute.xlu0 0
    %92 = vperm.xlu0 %91, %v39
    %v93 = vpop.permute.xlu0 %92
    %94 = vset.pattern.permute.xlu0 0
    %95 = vperm.xlu0 %94, %v40
    %v96 = vpop.permute.xlu0 %95
    %97 = vset.pattern.permute.xlu0 0
    %98 = vperm.xlu0 %97, %v41
    %v99 = vpop.permute.xlu0 %98
    %100 = vset.pattern.permute.xlu0 0
    %101 = vperm.xlu0 %100, %v42
    %v102 = vpop.permute.xlu0 %101
    %103 = vset.pattern.permute.xlu0 0
    %104 = vperm.xlu0 %103, %v43
    %v105 = vpop.permute.xlu0 %104
    %106 = vset.pattern.permute.xlu0 0
    %107 = vperm.xlu0 %106, %v44
    %v108 = vpop.permute.xlu0 %107
    %109 = vset.pattern.permute.xlu0 0
    %110 = vperm.xlu0 %109, %v45
    %v111 = vpop.permute.xlu0 %110
    %v112 = vlaneseq
    %v113 = vshrl.u32 %v112, 7
    %v114 = vsub.s32 0, %v113
    %v115 = vrot.slane %v62, %v114
    %vm116 = vcmp.eq.s32.totalorder %v66, %v115
    %vm117 = vcmp.eq.s32.totalorder %v69, %v115
    %vm118 = vcmp.eq.s32.totalorder %v72, %v115
    %vm119 = vcmp.eq.s32.totalorder %v75, %v115
    %vm120 = vcmp.eq.s32.totalorder %v78, %v115
    %vm121 = vcmp.eq.s32.totalorder %v81, %v115
    %vm122 = vcmp.eq.s32.totalorder %v84, %v115
    %vm123 = vcmp.eq.s32.totalorder %v87, %v115
    %vm124 = vcmp.eq.s32.totalorder %v90, %v115
    %vm125 = vcmp.eq.s32.totalorder %v93, %v115
    %vm126 = vcmp.eq.s32.totalorder %v96, %v115
    %vm127 = vcmp.eq.s32.totalorder %v99, %v115
    %vm128 = vcmp.eq.s32.totalorder %v102, %v115
    %vm129 = vcmp.eq.s32.totalorder %v105, %v115
    %vm130 = vcmp.eq.s32.totalorder %v108, %v115
    %vm131 = vcmp.eq.s32.totalorder %v111, %v115
    %vm132 = vcmp.ge.s32.totalorder %v62, 0
    %v133 = vsel %vm132, 1, 0
    %v134 = vlaneseq
    %v135 = vshrl.u32 %v134, 7
    %v136 = vsub.s32 0, %v135
    %v137 = vrot.slane %v133, %v136
    %vm138 = vcmp.eq.s32.totalorder %v137, 1
    %vm139 = vmand %vm116, %vm138
    %vm140 = vmand %vm117, %vm138
    %vm141 = vmand %vm118, %vm138
    %vm142 = vmand %vm119, %vm138
    %vm143 = vmand %vm120, %vm138
    %vm144 = vmand %vm121, %vm138
    %vm145 = vmand %vm122, %vm138
    %vm146 = vmand %vm123, %vm138
    %vm147 = vmand %vm124, %vm138
    %vm148 = vmand %vm125, %vm138
    %vm149 = vmand %vm126, %vm138
    %vm150 = vmand %vm127, %vm138
    %vm151 = vmand %vm128, %vm138
    %vm152 = vmand %vm129, %vm138
    %vm153 = vmand %vm130, %vm138
    %vm154 = vmand %vm131, %vm138
    %155 = vset.pattern.permute.xlu0 0
    %156 = vperm.xlu0 %155, %v46
    %v157 = vpop.permute.xlu0 %156
    %158 = vset.pattern.permute.xlu0 0
    %159 = vperm.xlu0 %158, %v47
    %v160 = vpop.permute.xlu0 %159
    %161 = vset.pattern.permute.xlu0 0
    %162 = vperm.xlu0 %161, %v48
    %v163 = vpop.permute.xlu0 %162
    %164 = vset.pattern.permute.xlu0 0
    %165 = vperm.xlu0 %164, %v49
    %v166 = vpop.permute.xlu0 %165
    %167 = vset.pattern.permute.xlu0 0
    %168 = vperm.xlu0 %167, %v50
    %v169 = vpop.permute.xlu0 %168
    %170 = vset.pattern.permute.xlu0 0
    %171 = vperm.xlu0 %170, %v51
    %v172 = vpop.permute.xlu0 %171
    %173 = vset.pattern.permute.xlu0 0
    %174 = vperm.xlu0 %173, %v52
    %v175 = vpop.permute.xlu0 %174
    %176 = vset.pattern.permute.xlu0 0
    %177 = vperm.xlu0 %176, %v53
    %v178 = vpop.permute.xlu0 %177
    %179 = vset.pattern.permute.xlu0 0
    %180 = vperm.xlu0 %179, %v54
    %v181 = vpop.permute.xlu0 %180
    %182 = vset.pattern.permute.xlu0 0
    %183 = vperm.xlu0 %182, %v55
    %v184 = vpop.permute.xlu0 %183
    %185 = vset.pattern.permute.xlu0 0
    %186 = vperm.xlu0 %185, %v56
    %v187 = vpop.permute.xlu0 %186
    %188 = vset.pattern.permute.xlu0 0
    %189 = vperm.xlu0 %188, %v57
    %v190 = vpop.permute.xlu0 %189
    %191 = vset.pattern.permute.xlu0 0
    %192 = vperm.xlu0 %191, %v58
    %v193 = vpop.permute.xlu0 %192
    %194 = vset.pattern.permute.xlu0 0
    %195 = vperm.xlu0 %194, %v59
    %v196 = vpop.permute.xlu0 %195
    %197 = vset.pattern.permute.xlu0 0
    %198 = vperm.xlu0 %197, %v60
    %v199 = vpop.permute.xlu0 %198
    %200 = vset.pattern.permute.xlu0 0
    %201 = vperm.xlu0 %200, %v61
    %v202 = vpop.permute.xlu0 %201
    %v203 = vlaneseq
    %v204 = vshrl.u32 %v203, 7
    %v205 = vsub.s32 0, %v204
    %v206 = vrot.slane %v63, %v205
    %vm207 = vcmp.lt.s32.totalorder %v157, %v206
    %vm208 = vcmp.lt.s32.totalorder %v160, %v206
    %vm209 = vcmp.lt.s32.totalorder %v163, %v206
    %vm210 = vcmp.lt.s32.totalorder %v166, %v206
    %vm211 = vcmp.lt.s32.totalorder %v169, %v206
    %vm212 = vcmp.lt.s32.totalorder %v172, %v206
    %vm213 = vcmp.lt.s32.totalorder %v175, %v206
    %vm214 = vcmp.lt.s32.totalorder %v178, %v206
    %vm215 = vcmp.lt.s32.totalorder %v181, %v206
    %vm216 = vcmp.lt.s32.totalorder %v184, %v206
    %vm217 = vcmp.lt.s32.totalorder %v187, %v206
    %vm218 = vcmp.lt.s32.totalorder %v190, %v206
    %vm219 = vcmp.lt.s32.totalorder %v193, %v206
    %vm220 = vcmp.lt.s32.totalorder %v196, %v206
    %vm221 = vcmp.lt.s32.totalorder %v199, %v206
    %vm222 = vcmp.lt.s32.totalorder %v202, %v206
    %vm223 = vmand %vm139, %vm207
    %vm224 = vmand %vm140, %vm208
    %vm225 = vmand %vm141, %vm209
    %vm226 = vmand %vm142, %vm210
    %vm227 = vmand %vm143, %vm211
    %vm228 = vmand %vm144, %vm212
    %vm229 = vmand %vm145, %vm213
    %vm230 = vmand %vm146, %vm214
    %vm231 = vmand %vm147, %vm215
    %vm232 = vmand %vm148, %vm216
    %vm233 = vmand %vm149, %vm217
    %vm234 = vmand %vm150, %vm218
    %vm235 = vmand %vm151, %vm219
    %vm236 = vmand %vm152, %vm220
    %vm237 = vmand %vm153, %vm221
    %vm238 = vmand %vm154, %vm222
    %v239 = vld [vmem:[#allocation2] sm:$0x1]
    %v240 = vsel %vm139, 1, 0
    %v241 = vsel %vm140, 1, 0
    %v242 = vsel %vm141, 1, 0
    %v243 = vsel %vm142, 1, 0
    %v244 = vsel %vm143, 1, 0
    %v245 = vsel %vm144, 1, 0
    %v246 = vsel %vm145, 1, 0
    %v247 = vsel %vm146, 1, 0
    %v248 = vsel %vm147, 1, 0
    %v249 = vsel %vm148, 1, 0
    %v250 = vsel %vm149, 1, 0
    %v251 = vsel %vm150, 1, 0
    %v252 = vsel %vm151, 1, 0
    %v253 = vsel %vm152, 1, 0
    %v254 = vsel %vm153, 1, 0
    %v255 = vsel %vm154, 1, 0
    %v256 = vcvt.s32.f32 %v240
    %v257 = vcvt.s32.f32 %v241
    %v258 = vcvt.s32.f32 %v242
    %v259 = vcvt.s32.f32 %v243
    %v260 = vcvt.s32.f32 %v244
    %v261 = vcvt.s32.f32 %v245
    %v262 = vcvt.s32.f32 %v246
    %v263 = vcvt.s32.f32 %v247
    %v264 = vcvt.s32.f32 %v248
    %v265 = vcvt.s32.f32 %v249
    %v266 = vcvt.s32.f32 %v250
    %v267 = vcvt.s32.f32 %v251
    %v268 = vcvt.s32.f32 %v252
    %v269 = vcvt.s32.f32 %v253
    %v270 = vcvt.s32.f32 %v254
    %v271 = vcvt.s32.f32 %v255
    %v272 = vpack.c.bf16 %v257, %v256
    %v273 = vpack.c.bf16 %v259, %v258
    %v274 = vpack.c.bf16 %v261, %v260
    %v275 = vpack.c.bf16 %v263, %v262
    %v276 = vpack.c.bf16 %v265, %v264
    %v277 = vpack.c.bf16 %v267, %v266
    %v278 = vpack.c.bf16 %v269, %v268
    %v279 = vpack.c.bf16 %v271, %v270
    %280 = vmatprep.subr.bf16.mxu0 0
    %281 = vmatpush1.bf16.msra.mxu0 %v272
    %282 = vmatprep.subr.bf16.mxu0 0
    %283 = vmatpush1.bf16.msra.mxu0 %v273
    %284 = vmatprep.subr.bf16.mxu0 0
    %285 = vmatpush1.bf16.msra.mxu0 %v274
    %286 = vmatprep.subr.bf16.mxu0 0
    %287 = vmatpush1.bf16.msra.mxu0 %v275
    %288 = vmatprep.subr.bf16.mxu0 0
    %289 = vmatpush1.bf16.msra.mxu0 %v276
    %290 = vmatprep.subr.bf16.mxu0 0
    %291 = vmatpush1.bf16.msra.mxu0 %v277
    %292 = vmatprep.subr.bf16.mxu0 0
    %293 = vmatpush1.bf16.msra.mxu0 %v278
    %294 = vmatprep.subr.bf16.mxu0 0
    %295 = vmatpush1.bf16.msra.mxu0 %v279
    %296 = vmatprep.subr.bf16.mxu0 0
    %297 = vmatpush1.bf16.msra.mxu0 0
    %298 = vmatprep.subr.bf16.mxu0 0
    %299 = vmatpush1.bf16.msra.mxu0 0
    %300 = vmatprep.subr.bf16.mxu0 0
    %301 = vmatpush1.bf16.msra.mxu0 0
    %302 = vmatprep.subr.bf16.mxu0 0
    %303 = vmatpush1.bf16.msra.mxu0 0
    %304 = vmatprep.subr.bf16.mxu0 0
    %305 = vmatpush1.bf16.msra.mxu0 0
    %306 = vmatprep.subr.bf16.mxu0 0
    %307 = vmatpush1.bf16.msra.mxu0 0
    %308 = vmatprep.subr.bf16.mxu0 0
    %309 = vmatpush1.bf16.msra.mxu0 0
    %310 = vmatprep.subr.bf16.mxu0 0
    %311 = vmatpush1.bf16.msra.mxu0 0
    %312 = vmatprep.mubr.bf16.mxu0 0
    %313 = vmatmul.mubr.bf16.gmra.mrb[0].mxu0 1065369472
    %v314 = vpop.f32.mrb[0].mxu0
    %v315 = vadd.f32 0.0, %v314
    %v316 = vpop.f32.mrb[0].mxu0
    %v317 = vpop.f32.mrb[0].mxu0
    %v318 = vpop.f32.mrb[0].mxu0
    %319 = vdwg.mxu0
    %v320 = vadd.f32 %v239, %v315
    %321 = vst [vmem:[#allocation2] sm:$0x1] %v320
    %v322 = vld [vmem:[#allocation3] sm:$0x1]
    %v323 = vsel %vm223, 1, 0
    %v324 = vsel %vm224, 1, 0
    %v325 = vsel %vm225, 1, 0
    %v326 = vsel %vm226, 1, 0
    %v327 = vsel %vm227, 1, 0
    %v328 = vsel %vm228, 1, 0
    %v329 = vsel %vm229, 1, 0
    %v330 = vsel %vm230, 1, 0
    %v331 = vsel %vm231, 1, 0
    %v332 = vsel %vm232, 1, 0
    %v333 = vsel %vm233, 1, 0
    %v334 = vsel %vm234, 1, 0
    %v335 = vsel %vm235, 1, 0
    %v336 = vsel %vm236, 1, 0
    %v337 = vsel %vm237, 1, 0
    %v338 = vsel %vm238, 1, 0
    %v339 = vcvt.s32.f32 %v323
    %v340 = vcvt.s32.f32 %v324
    %v341 = vcvt.s32.f32 %v325
    %v342 = vcvt.s32.f32 %v326
    %v343 = vcvt.s32.f32 %v327
    %v344 = vcvt.s32.f32 %v328
    %v345 = vcvt.s32.f32 %v329
    %v346 = vcvt.s32.f32 %v330
    %v347 = vcvt.s32.f32 %v331
    %v348 = vcvt.s32.f32 %v332
    %v349 = vcvt.s32.f32 %v333
    %v350 = vcvt.s32.f32 %v334
    %v351 = vcvt.s32.f32 %v335
    %v352 = vcvt.s32.f32 %v336
    %v353 = vcvt.s32.f32 %v337
    %v354 = vcvt.s32.f32 %v338
    %v355 = vpack.c.bf16 %v340, %v339
    %v356 = vpack.c.bf16 %v342, %v341
    %v357 = vpack.c.bf16 %v344, %v343
    %v358 = vpack.c.bf16 %v346, %v345
    %v359 = vpack.c.bf16 %v348, %v347
    %v360 = vpack.c.bf16 %v350, %v349
    %v361 = vpack.c.bf16 %v352, %v351
    %v362 = vpack.c.bf16 %v354, %v353
    %363 = vmatprep.subr.bf16.mxu0 0
    %364 = vmatpush1.bf16.msra.mxu0 %v355
    %365 = vmatprep.subr.bf16.mxu0 0
    %366 = vmatpush1.bf16.msra.mxu0 %v356
    %367 = vmatprep.subr.bf16.mxu0 0
    %368 = vmatpush1.bf16.msra.mxu0 %v357
    %369 = vmatprep.subr.bf16.mxu0 0
    %370 = vmatpush1.bf16.msra.mxu0 %v358
    %371 = vmatprep.subr.bf16.mxu0 0
    %372 = vmatpush1.bf16.msra.mxu0 %v359
    %373 = vmatprep.subr.bf16.mxu0 0
    %374 = vmatpush1.bf16.msra.mxu0 %v360
    %375 = vmatprep.subr.bf16.mxu0 0
    %376 = vmatpush1.bf16.msra.mxu0 %v361
    %377 = vmatprep.subr.bf16.mxu0 0
    %378 = vmatpush1.bf16.msra.mxu0 %v362
    %379 = vmatprep.subr.bf16.mxu0 0
    %380 = vmatpush1.bf16.msra.mxu0 0
    %381 = vmatprep.subr.bf16.mxu0 0
    %382 = vmatpush1.bf16.msra.mxu0 0
    %383 = vmatprep.subr.bf16.mxu0 0
    %384 = vmatpush1.bf16.msra.mxu0 0
    %385 = vmatprep.subr.bf16.mxu0 0
    %386 = vmatpush1.bf16.msra.mxu0 0
    %387 = vmatprep.subr.bf16.mxu0 0
    %388 = vmatpush1.bf16.msra.mxu0 0
    %389 = vmatprep.subr.bf16.mxu0 0
    %390 = vmatpush1.bf16.msra.mxu0 0
    %391 = vmatprep.subr.bf16.mxu0 0
    %392 = vmatpush1.bf16.msra.mxu0 0
    %393 = vmatprep.subr.bf16.mxu0 0
    %394 = vmatpush1.bf16.msra.mxu0 0
    %395 = vmatprep.mubr.bf16.mxu0 0
    %396 = vmatmul.mubr.bf16.gmra.mrb[0].mxu0 1065369472
    %v397 = vpop.f32.mrb[0].mxu0
    %v398 = vadd.f32 0.0, %v397
    %v399 = vpop.f32.mrb[0].mxu0
    %v400 = vpop.f32.mrb[0].mxu0
    %v401 = vpop.f32.mrb[0].mxu0
    %402 = vdwg.mxu0
    %v403 = vadd.f32 %v322, %v398
    %404 = vst [vmem:[#allocation3] sm:$0x1] %v403
    // Predicated region
    $region22: #{tpu_custom_call.1} parent=1 // pred_check
      %p405 = pneg %p24
    $region23: #{tpu_custom_call.1} parent=1 // pred_check_branch
      %407 = sbr.rel (%p405) target = $region25
    $region24: #{tpu_custom_call.1} parent=1 // pred_region
      %v408 = vcvt.s32.f32 %v133
      %v409 = vld [vmem:[#allocation2] sm:$0x1]
      %v410 = vld [vmem:[#allocation3] sm:$0x1]
      %vm411 = vcmp.lt.f32.partialorder %v410, 0.5
      %v412 = vsel %vm411, 1, 0
      %v413 = vcvt.s32.f32 %v412
      %v414 = vmul.f32 %v408, %v413
      %415 = vst [vmem:[#allocation4] sm:$0x1] %v414
      %v416 = vsub.f32 %v409, %v410
      %vm417 = vcmp.lt.f32.partialorder %v416, 1.5
      %v418 = vsel %vm417, 1, 0
      %v419 = vcvt.s32.f32 %v418
      %v420 = vmul.f32 %v408, %v419
      %421 = vst [vmem:[#allocation6] sm:$0x1] %v420
      %422 = vst [vmem:[#allocation8] sm:$0x1] %v408
    $region25: #{tpu_custom_call.1} parent=1 // pred_fallthru
      _
    // Predicated region
    $region26: #{tpu_custom_call.1} parent=1 // pred_check
      _
    $region27: #{tpu_custom_call.1} parent=1 // pred_check_branch
      %424 = sbr.rel (0) target = $region29
    $region28: #{tpu_custom_call.1} parent=1 // pred_region
      %s426 = ssub.s32 16, 16
      %427 = vsyncadd [#allocation5], %s426
      %s429 = sshll.u32 [#allocation4], 4
      %s430 = int_to_ptr.vmem [resolvable:$true] %s429
      %432 = dma.vmem_to_hbm [thread:$0]  %s430, 16, %s4, [#allocation5]
    $region29: #{tpu_custom_call.1} parent=1 // pred_fallthru
      _
    // Predicated region
    $region30: #{tpu_custom_call.1} parent=1 // pred_check
      _
    $region31: #{tpu_custom_call.1} parent=1 // pred_check_branch
      %434 = sbr.rel (0) target = $region33
    $region32: #{tpu_custom_call.1} parent=1 // pred_region
      %s436 = ssub.s32 16, 16
      %437 = vsyncadd [#allocation7], %s436
      %s439 = sshll.u32 [#allocation6], 4
      %s440 = int_to_ptr.vmem [resolvable:$true] %s439
      %442 = dma.vmem_to_hbm [thread:$0]  %s440, 16, %s5, [#allocation7]
    $region33: #{tpu_custom_call.1} parent=1 // pred_fallthru
      _
    // Predicated region
    $region34: #{tpu_custom_call.1} parent=1 // pred_check
      _
    $region35: #{tpu_custom_call.1} parent=1 // pred_check_branch
      %444 = sbr.rel (0) target = $region37
    $region36: #{tpu_custom_call.1} parent=1 // pred_region
      %s446 = ssub.s32 16, 16
      %447 = vsyncadd [#allocation7], %s446
      %s449 = sshll.u32 [#allocation8], 4
      %s450 = int_to_ptr.vmem [resolvable:$true] %s449
      %452 = dma.vmem_to_hbm [thread:$0]  %s450, 16, %s6, [#allocation7]
    $region37: #{tpu_custom_call.1} parent=1 // pred_fallthru
      _
    // Predicated region
    $region38: #{tpu_custom_call.1} parent=1 // pred_check
      _
    $region39: #{tpu_custom_call.1} parent=1 // pred_check_branch
      %454 = sbr.rel (0) target = $region41
    $region40: #{tpu_custom_call.1} parent=1 // pred_region
      %455 = dma.done [#allocation5], 16
    $region41: #{tpu_custom_call.1} parent=1 // pred_fallthru
      _
    // Predicated region
    $region42: #{tpu_custom_call.1} parent=1 // pred_check
      _
    $region43: #{tpu_custom_call.1} parent=1 // pred_check_branch
      %457 = sbr.rel (0) target = $region45
    $region44: #{tpu_custom_call.1} parent=1 // pred_region
      %458 = dma.done [#allocation7], 16
    $region45: #{tpu_custom_call.1} parent=1 // pred_fallthru
      _
    // Predicated region
    $region46: #{tpu_custom_call.1} parent=1 // pred_check
      _
    $region47: #{tpu_custom_call.1} parent=1 // pred_check_branch
      %460 = sbr.rel (0) target = $region49
    $region48: #{tpu_custom_call.1} parent=1 // pred_region
      %461 = dma.done [#allocation7], 16
    $region49: #{tpu_custom_call.1} parent=1 // pred_fallthru
      _
    %462 = vsyncpa [#allocation5], 1
    %463 = vsyncpa [#allocation7], 1

</llo_original>
